<compile_context>
chip_gen: v5e
topology: v5e:2x2
jax: 0.10.0
libtpu: 0.0.40
codegen_flags: <defaults>
</compile_context>

<pallas_src>
import functools

import jax
import jax.numpy as jnp
from jax.experimental import pallas as pl
from jax.experimental.pallas import tpu as pltpu


def _mlp_kernel(x_ref, w1_ref, b1_ref, w2_ref, b2_ref, w3_ref, b3_ref, o_ref):
    """One batch tile of the fused 3-layer MLP (weights resident in VMEM)."""
    # MXU matmuls in bf16 with f32 accumulation; bias-add / ReLU in f32.
    x = x_ref[...].astype(jnp.bfloat16)
    h1 = jnp.dot(x, w1_ref[...], preferred_element_type=jnp.float32) + b1_ref[...]
    h1 = jnp.maximum(h1, 0.0).astype(jnp.bfloat16)
    h2 = jnp.dot(h1, w2_ref[...], preferred_element_type=jnp.float32) + b2_ref[...]
    h2 = jnp.maximum(h2, 0.0).astype(jnp.bfloat16)
    # Final layer: lane-dense (128-padded) output, unmasked full-lane store.
    o_ref[...] = (jnp.dot(h2, w3_ref[...], preferred_element_type=jnp.float32)
                  + b3_ref[...]).astype(o_ref.dtype)


def _const_spec(shape):
    """Full-array block, same block every grid step (stays resident in VMEM)."""
    return pl.BlockSpec(shape, lambda i: (0,) * len(shape))


@jax.jit
def fctd_forward_batched(x2d, w1, b1, w2, b2, w3p, b3p):
    """x2d: (B, total_fc_dims) f32 -> (B, n_out_padded) f32 (padded lanes)."""
    B, D = x2d.shape
    n_out_p = w3p.shape[1]

    # Batch tile: large (overhead/HBM-bound regime), multiple of 8 sublanes.
    TB = 1024
    Bp = max(8, -(-B // 8) * 8)          # round B up to a multiple of 8
    if Bp <= TB:
        TB = Bp                           # single tile for small batches
    else:
        Bp = -(-B // TB) * TB             # round up to a multiple of TB
    if Bp != B:
        x2d = jnp.pad(x2d, ((0, Bp - B), (0, 0)))

    grid = (Bp // TB,)
    out = pl.pallas_call(
        _mlp_kernel,
        out_shape=jax.ShapeDtypeStruct((Bp, n_out_p), jnp.float32),
        grid=grid,
        in_specs=[
            pl.BlockSpec((TB, D), lambda i: (i, 0)),      # x: walks batch axis
            _const_spec(w1.shape), _const_spec(b1.shape), # weights: resident
            _const_spec(w2.shape), _const_spec(b2.shape),
            _const_spec(w3p.shape), _const_spec(b3p.shape),
        ],
        out_specs=pl.BlockSpec((TB, n_out_p), lambda i: (i, 0)),
        compiler_params=pltpu.CompilerParams(
            dimension_semantics=("parallel",)),            # megacore on v7x
    )(x2d, w1, b1, w2, b2, w3p, b3p)
    return out[:B]


class FCTDNetworkPallas:
    """JAX/Pallas re-implementation of FCTDNetwork's forward pass."""

    def __init__(self, input_dims, n_actions, fc1_dims, fc2_dims, key):
        self.input_dims = tuple(input_dims)
        self.input_dim_len = len(input_dims)
        self.n_actions = int(n_actions)
        self.total_fc_dims = 1
        for d in input_dims:
            self.total_fc_dims *= d

        # Lane-dense padded output width (multiple of 128).
        self.n_out_padded = max(128, -(-self.n_actions // 128) * 128)

        # Deterministic init mimicking nn.Linear default (U(-1/sqrt(fan_in), +)).
        # Weights stored as (in, out) so the kernel computes x @ W + b directly.
        def init_linear(key, fan_in, fan_out):
            kw, kb = jax.random.split(key)
            bound = 1.0 / jnp.sqrt(jnp.float32(fan_in))
            w = jax.random.uniform(kw, (fan_in, fan_out), jnp.float32, -bound, bound)
            b = jax.random.uniform(kb, (1, fan_out), jnp.float32, -bound, bound)
            return w, b

        k1, k2, k3 = jax.random.split(key, 3)
        w1, b1 = init_linear(k1, self.total_fc_dims, fc1_dims)
        w2, b2 = init_linear(k2, fc1_dims, fc2_dims)
        w3, b3 = init_linear(k3, fc2_dims, self.n_actions)

        # Weights in bf16 for the MXU; biases stay f32 (added on f32 accumulator).
        self.w1 = w1.astype(jnp.bfloat16)
        self.w2 = w2.astype(jnp.bfloat16)
        self.b1, self.b2 = b1, b2
        # Zero-pad w3/b3 columns to the lane-dense width; padded lanes stay inert.
        pad = self.n_out_padded - self.n_actions
        self.w3 = jnp.pad(w3, ((0, 0), (0, pad))).astype(jnp.bfloat16)
        self.b3 = jnp.pad(b3, ((0, 0), (0, pad)))

    def forward(self, state):
        state = jnp.asarray(state, jnp.float32)
        if state.ndim == self.input_dim_len:
            # Unbatched: one row. Launch overhead dominates; callers should batch.
            x2d = state.reshape(1, self.total_fc_dims)
            out = fctd_forward_batched(x2d, self.w1, self.b1, self.w2, self.b2,
                                       self.w3, self.b3)
            return out[0, :self.n_actions]
        else:
            B = state.shape[0]
            x2d = state.reshape(B, self.total_fc_dims)
            out = fctd_forward_batched(x2d, self.w1, self.b1, self.w2, self.b2,
                                       self.w3, self.b3)
            return out[:, :self.n_actions]


def _reference_forward(net, x2d):
    """Pure-JAX reference with the same bf16-matmul / f32-accumulate numerics."""
    x = x2d.astype(jnp.bfloat16)
    h1 = jnp.maximum(
        jnp.dot(x, net.w1, preferred_element_type=jnp.float32) + net.b1, 0.0)
    h2 = jnp.maximum(
        jnp.dot(h1.astype(jnp.bfloat16), net.w2,
                preferred_element_type=jnp.float32) + net.b2, 0.0)
    out = (jnp.dot(h2.astype(jnp.bfloat16), net.w3,
                   preferred_element_type=jnp.float32) + net.b3)
    return out[:, :net.n_actions]


if __name__ == "__main__":
    key = jax.random.PRNGKey(0)
    k_params, k_state = jax.random.split(key)

    # Small, module-consistent shapes.
    input_dims = (4, 16)          # total_fc_dims = 64
    n_actions = 6
    fc1_dims, fc2_dims = 32, 32   # get_hidden_layer_sizes(fc_dims) -> (32, 32)
    batch = 2

    net = FCTDNetworkPallas(input_dims, n_actions, fc1_dims, fc2_dims, k_params)

    # Batched input: (B, *input_dims)
    state_batched = jax.random.normal(k_state, (batch,) + input_dims, jnp.float32)
    out_batched = jax.block_until_ready(net.forward(state_batched))

    # Unbatched input: shape == input_dims
    state_single = state_batched[0]
    out_single = jax.block_until_ready(net.forward(state_single))

    # Cross-check against pure-JAX reference (bf16 matmul => looser tolerance).
    ref = _reference_forward(net, state_batched.reshape(batch, -1))
    assert out_batched.shape == (batch, n_actions)
    assert out_single.shape == (n_actions,)
    assert jnp.allclose(out_batched, ref, atol=2e-2, rtol=2e-2)
    assert jnp.allclose(out_single, ref[0], atol=2e-2, rtol=2e-2)

    print("KERNEL_OK")
</pallas_src>

<mosaic_0001>
module attributes {stable_mosaic.version = 11 : i64} {
  func.func @_mlp_kernel(%arg0: i32, %arg1: memref<8x64xf32, #tpu.memory_space<vmem>>, %arg2: memref<64x32xbf16, #tpu.memory_space<vmem>>, %arg3: memref<1x32xf32, #tpu.memory_space<vmem>>, %arg4: memref<32x32xbf16, #tpu.memory_space<vmem>>, %arg5: memref<1x32xf32, #tpu.memory_space<vmem>>, %arg6: memref<32x128xbf16, #tpu.memory_space<vmem>>, %arg7: memref<1x128xf32, #tpu.memory_space<vmem>>, %arg8: memref<8x128xf32, #tpu.memory_space<vmem>>) attributes {dimension_semantics = [#tpu.dimension_semantics<parallel>], iteration_bounds = array<i64: 1>, scalar_prefetch = 0 : i64, scratch_operands = 0 : i64, tpu.core_type = #tpu.core_type<tc>, window_params = [{transform_indices = @transform_0, window_bounds = array<i64: 8, 64>}, {pipeline_mode = #tpu.pipeline_mode<synchronous>, transform_indices = @transform_1, window_bounds = array<i64: 64, 32>}, {pipeline_mode = #tpu.pipeline_mode<synchronous>, transform_indices = @transform_2, window_bounds = array<i64: 1, 32>}, {pipeline_mode = #tpu.pipeline_mode<synchronous>, transform_indices = @transform_3, window_bounds = array<i64: 32, 32>}, {pipeline_mode = #tpu.pipeline_mode<synchronous>, transform_indices = @transform_4, window_bounds = array<i64: 1, 32>}, {pipeline_mode = #tpu.pipeline_mode<synchronous>, transform_indices = @transform_5, window_bounds = array<i64: 32, 128>}, {pipeline_mode = #tpu.pipeline_mode<synchronous>, transform_indices = @transform_6, window_bounds = array<i64: 1, 128>}, {transform_indices = @transform_7, window_bounds = array<i64: 8, 128>}]} {
    %c0 = arith.constant 0 : index
    %c0_0 = arith.constant 0 : index
    %0 = vector.load %arg1[%c0, %c0_0] : memref<8x64xf32, #tpu.memory_space<vmem>>, vector<8x64xf32>
    %1 = arith.truncf %0 : vector<8x64xf32> to vector<8x64xbf16>
    %c0_1 = arith.constant 0 : index
    %c0_2 = arith.constant 0 : index
    %2 = vector.load %arg2[%c0_1, %c0_2] : memref<64x32xbf16, #tpu.memory_space<vmem>>, vector<64x32xbf16>
    %cst = arith.constant dense<0.000000e+00> : vector<8x32xf32>
    %3 = tpu.matmul %1, %2, %cst {dimension_numbers = #tpu.dot_dimension_numbers<[1], [0], [0], [1], [0, 0, 1, 1], [], []>} : vector<8x64xbf16>, vector<64x32xbf16>, vector<8x32xf32> -> vector<8x32xf32>
    %c0_3 = arith.constant 0 : index
    %c0_4 = arith.constant 0 : index
    %4 = vector.load %arg3[%c0_3, %c0_4] : memref<1x32xf32, #tpu.memory_space<vmem>>, vector<1x32xf32>
    %5 = vector.broadcast %4 : vector<1x32xf32> to vector<8x32xf32>
    %6 = arith.addf %3, %5 : vector<8x32xf32>
    %cst_5 = arith.constant 0.000000e+00 : f32
    %7 = vector.broadcast %cst_5 : f32 to vector<8x32xf32>
    %8 = arith.maximumf %6, %7 : vector<8x32xf32>
    %9 = arith.truncf %8 : vector<8x32xf32> to vector<8x32xbf16>
    %c0_6 = arith.constant 0 : index
    %c0_7 = arith.constant 0 : index
    %10 = vector.load %arg4[%c0_6, %c0_7] : memref<32x32xbf16, #tpu.memory_space<vmem>>, vector<32x32xbf16>
    %cst_8 = arith.constant dense<0.000000e+00> : vector<8x32xf32>
    %11 = tpu.matmul %9, %10, %cst_8 {dimension_numbers = #tpu.dot_dimension_numbers<[1], [0], [0], [1], [0, 0, 1, 1], [], []>} : vector<8x32xbf16>, vector<32x32xbf16>, vector<8x32xf32> -> vector<8x32xf32>
    %c0_9 = arith.constant 0 : index
    %c0_10 = arith.constant 0 : index
    %12 = vector.load %arg5[%c0_9, %c0_10] : memref<1x32xf32, #tpu.memory_space<vmem>>, vector<1x32xf32>
    %13 = vector.broadcast %12 : vector<1x32xf32> to vector<8x32xf32>
    %14 = arith.addf %11, %13 : vector<8x32xf32>
    %cst_11 = arith.constant 0.000000e+00 : f32
    %15 = vector.broadcast %cst_11 : f32 to vector<8x32xf32>
    %16 = arith.maximumf %14, %15 : vector<8x32xf32>
    %17 = arith.truncf %16 : vector<8x32xf32> to vector<8x32xbf16>
    %c0_12 = arith.constant 0 : index
    %c0_13 = arith.constant 0 : index
    %18 = vector.load %arg6[%c0_12, %c0_13] : memref<32x128xbf16, #tpu.memory_space<vmem>>, vector<32x128xbf16>
    %cst_14 = arith.constant dense<0.000000e+00> : vector<8x128xf32>
    %19 = tpu.matmul %17, %18, %cst_14 {dimension_numbers = #tpu.dot_dimension_numbers<[1], [0], [0], [1], [0, 0, 1, 1], [], []>} : vector<8x32xbf16>, vector<32x128xbf16>, vector<8x128xf32> -> vector<8x128xf32>
    %c0_15 = arith.constant 0 : index
    %c0_16 = arith.constant 0 : index
    %20 = vector.load %arg7[%c0_15, %c0_16] : memref<1x128xf32, #tpu.memory_space<vmem>>, vector<1x128xf32>
    %21 = vector.broadcast %20 : vector<1x128xf32> to vector<8x128xf32>
    %22 = arith.addf %19, %21 : vector<8x128xf32>
    %c0_17 = arith.constant 0 : index
    %c0_18 = arith.constant 0 : index
    %23 = vector.load %arg8[%c0_17, %c0_18] : memref<8x128xf32, #tpu.memory_space<vmem>>, vector<8x128xf32>
    tpu.vector_store %arg8[%c0_17, %c0_18], %22 {strides = array<i32>} : memref<8x128xf32, #tpu.memory_space<vmem>>, vector<8x128xf32>,
    return
  }
  func.func @transform_0(%arg0: i32) -> (i32, i32) {
    %c0_i32 = arith.constant 0 : i32
    %c0_i32_0 = arith.constant 0 : i32
    return %arg0, %c0_i32 : i32, i32
  }
  func.func @transform_1(%arg0: i32) -> (i32, i32) {
    %c0_i32 = arith.constant 0 : i32
    %c0_i32_0 = arith.constant 0 : i32
    %c0_i32_1 = arith.constant 0 : i32
    return %c0_i32, %c0_i32_0 : i32, i32
  }
  func.func @transform_2(%arg0: i32) -> (i32, i32) {
    %c0_i32 = arith.constant 0 : i32
    %c0_i32_0 = arith.constant 0 : i32
    %c0_i32_1 = arith.constant 0 : i32
    return %c0_i32, %c0_i32_0 : i32, i32
  }
  func.func @transform_3(%arg0: i32) -> (i32, i32) {
    %c0_i32 = arith.constant 0 : i32
    %c0_i32_0 = arith.constant 0 : i32
    %c0_i32_1 = arith.constant 0 : i32
    return %c0_i32, %c0_i32_0 : i32, i32
  }
  func.func @transform_4(%arg0: i32) -> (i32, i32) {
    %c0_i32 = arith.constant 0 : i32
    %c0_i32_0 = arith.constant 0 : i32
    %c0_i32_1 = arith.constant 0 : i32
    return %c0_i32, %c0_i32_0 : i32, i32
  }
  func.func @transform_5(%arg0: i32) -> (i32, i32) {
    %c0_i32 = arith.constant 0 : i32
    %c0_i32_0 = arith.constant 0 : i32
    %c0_i32_1 = arith.constant 0 : i32
    return %c0_i32, %c0_i32_0 : i32, i32
  }
  func.func @transform_6(%arg0: i32) -> (i32, i32) {
    %c0_i32 = arith.constant 0 : i32
    %c0_i32_0 = arith.constant 0 : i32
    %c0_i32_1 = arith.constant 0 : i32
    return %c0_i32, %c0_i32_0 : i32, i32
  }
  func.func @transform_7(%arg0: i32) -> (i32, i32) {
    %c0_i32 = arith.constant 0 : i32
    %c0_i32_0 = arith.constant 0 : i32
    return %arg0, %c0_i32 : i32, i32
  }
}

</mosaic_0001>

<llo_original>
// kernel: fctd_forward_batched.1
$region0: #{fctd_forward_batched.1}
  #allocation0 [shape = 'u32[]', space=smem, size = 0x4, offset = 0x4, fixed_abs, tag = 'smem constant byte address 0x4 - core index']
  #allocation1 [shape = 'u32[72,128]{1,0:T(1,128)}', space=vmem, size = 0x9000, scoped, tag = 'internal scratch']
  %s0 = inlined_call_operand.vmem [shape: f32[8,64], index: 0, kind: input, shape index: {}]
  %s1 = inlined_call_operand.vmem [shape: bf16[64,32], index: 1, kind: input, shape index: {}]
  %s2 = inlined_call_operand.vmem [shape: f32[1,32], index: 2, kind: input, shape index: {}]
  %s3 = inlined_call_operand.vmem [shape: bf16[32,32], index: 3, kind: input, shape index: {}]
  %s4 = inlined_call_operand.vmem [shape: f32[1,32], index: 4, kind: input, shape index: {}]
  %s5 = inlined_call_operand.vmem [shape: bf16[32,128], index: 5, kind: input, shape index: {}]
  %s6 = inlined_call_operand.vmem [shape: f32[1,128], index: 6, kind: input, shape index: {}]
  %s7 = inlined_call_operand.vmem [shape: f32[8,128], index: 7, kind: output, shape index: {}]
  %s8 = sld [smem:[#allocation0]]
  $region38: #{fctd_forward_batched.1} parent=0
    _
  %s10 = ssub.s32 1, %s8
  %s11 = scalar_select 0, %s10, %s8
  // Predicated region
  $region2: #{fctd_forward_batched.1} parent=0 // pred_check
    _
  $region3: #{fctd_forward_batched.1} parent=0 // pred_check_branch
    %13 = sbr.rel (0) target = $region5
  $region4: #{fctd_forward_batched.1} parent=0 // pred_region
    _
  $region5: #{fctd_forward_batched.1} parent=0 // pred_fallthru
    _
  // Predicated region
  $region6: #{fctd_forward_batched.1} parent=0 // pred_check
    _
  $region7: #{fctd_forward_batched.1} parent=0 // pred_check_branch
    %15 = sbr.rel (0) target = $region9
  $region8: #{fctd_forward_batched.1} parent=0 // pred_region
    _
  $region9: #{fctd_forward_batched.1} parent=0 // pred_fallthru
    _
  // Predicated region
  $region10: #{fctd_forward_batched.1} parent=0 // pred_check
    _
  $region11: #{fctd_forward_batched.1} parent=0 // pred_check_branch
    %17 = sbr.rel (0) target = $region13
  $region12: #{fctd_forward_batched.1} parent=0 // pred_region
    _
  $region13: #{fctd_forward_batched.1} parent=0 // pred_fallthru
    _
  // Predicated region
  $region14: #{fctd_forward_batched.1} parent=0 // pred_check
    _
  $region15: #{fctd_forward_batched.1} parent=0 // pred_check_branch
    %19 = sbr.rel (0) target = $region17
  $region16: #{fctd_forward_batched.1} parent=0 // pred_region
    _
  $region17: #{fctd_forward_batched.1} parent=0 // pred_fallthru
    _
  // Predicated region
  $region18: #{fctd_forward_batched.1} parent=0 // pred_check
    _
  $region19: #{fctd_forward_batched.1} parent=0 // pred_check_branch
    %21 = sbr.rel (0) target = $region21
  $region20: #{fctd_forward_batched.1} parent=0 // pred_region
    _
  $region21: #{fctd_forward_batched.1} parent=0 // pred_fallthru
    _
  // Predicated region
  $region22: #{fctd_forward_batched.1} parent=0 // pred_check
    _
  $region23: #{fctd_forward_batched.1} parent=0 // pred_check_branch
    %23 = sbr.rel (0) target = $region25
  $region24: #{fctd_forward_batched.1} parent=0 // pred_region
    _
  $region25: #{fctd_forward_batched.1} parent=0 // pred_fallthru
    _
  // Predicated region
  $region26: #{fctd_forward_batched.1} parent=0 // pred_check
    _
  $region27: #{fctd_forward_batched.1} parent=0 // pred_check_branch
    %25 = sbr.rel (0) target = $region29
  $region28: #{fctd_forward_batched.1} parent=0 // pred_region
    _
  $region29: #{fctd_forward_batched.1} parent=0 // pred_fallthru
    _
  %v27 = vld [vmem:[%s0] sm:$0xff]
  %v28 = vpack.c.bf16 %v27, %v27
  %v29 = vld [vmem:[%s1] sm:$0xf]
  %v30 = vld [vmem:[%s1 + $0x4] sm:$0xf]
  %v31 = vld [vmem:[%s1 + $0x8] sm:$0xf]
  %v32 = vld [vmem:[%s1 + $0xc] sm:$0xf]
  %v33 = vld [vmem:[%s1 + $0x10] sm:$0xf]
  %v34 = vld [vmem:[%s1 + $0x14] sm:$0xf]
  %v35 = vld [vmem:[%s1 + $0x18] sm:$0xf]
  %v36 = vld [vmem:[%s1 + $0x1c] sm:$0xf]
  %v37 = vld [vmem:[%s2] sm:$0x1]
  %v39 = vperm.slane %v37, 0
  %v49 = vunpack.c.l.b16 %v29
  %v50 = vunpack.c.l.b16 %v30
  %v51 = vunpack.c.l.b16 %v31
  %v52 = vunpack.c.l.b16 %v32
  %v53 = vunpack.c.l.b16 %v33
  %v54 = vunpack.c.l.b16 %v34
  %v55 = vunpack.c.l.b16 %v35
  %v56 = vunpack.c.l.b16 %v36
  %v57 = vpack.c.b16 %v50, %v49
  %v58 = vpack.c.b16 %v52, %v51
  %v59 = vpack.c.b16 %v54, %v53
  %v60 = vpack.c.b16 %v56, %v55
  %vm65 = vcmask 523264
  %v67 = vsel %vm65, %v28, 0
  %69 = vmatpush.bf16.msra.mxu0 0
  %70 = vmatpush.bf16.msra.mxu0 0
  %71 = vmatpush.bf16.msra.mxu0 0
  %72 = vmatpush.bf16.msra.mxu0 0
  %73 = vmatpush.bf16.msra.mxu0 %v60
  %74 = vmatpush.bf16.msra.mxu0 %v59
  %75 = vmatpush.bf16.msra.mxu0 %v58
  %76 = vmatpush.bf16.msra.mxu0 %v57
  %77 = vmatmul.bf16.gmra.mxu0 %v67
  %v78 = vpop.f32.mrf.mxu0
  %v79 = vadd.f32 %v39, %v78
  %v80 = vpop.f32.mrf.mxu0
  %81 = vdwg.mxu0
  %v82 = vmax.f32 %v79, 0.0
  %v83 = vpack.c.bf16 %v82, %v82
  %v84 = vld [vmem:[%s3] sm:$0xf]
  %v85 = vld [vmem:[%s3 + $0x4] sm:$0xf]
  %v86 = vld [vmem:[%s3 + $0x8] sm:$0xf]
  %v87 = vld [vmem:[%s3 + $0xc] sm:$0xf]
  %v88 = vld [vmem:[%s4] sm:$0x1]
  %v90 = vperm.slane %v88, 0
  %v96 = vunpack.c.l.b16 %v84
  %v97 = vunpack.c.l.b16 %v85
  %v98 = vunpack.c.l.b16 %v86
  %v99 = vunpack.c.l.b16 %v87
  %v100 = vpack.c.b16 %v97, %v96
  %v101 = vpack.c.b16 %v99, %v98
  %vm104 = vcmask 261120
  %v106 = vsel %vm104, %v83, 0
  %108 = vmatpush.bf16.msra.mxu0 0
  %109 = vmatpush.bf16.msra.mxu0 0
  %110 = vmatpush.bf16.msra.mxu0 0
  %111 = vmatpush.bf16.msra.mxu0 0
  %112 = vmatpush.bf16.msra.mxu0 0
  %113 = vmatpush.bf16.msra.mxu0 0
  %114 = vmatpush.bf16.msra.mxu0 %v101
  %115 = vmatpush.bf16.msra.mxu0 %v100
  %116 = vmatmul.bf16.gmra.mxu0 %v106
  %v117 = vpop.f32.mrf.mxu0
  %v118 = vadd.f32 %v90, %v117
  %v119 = vpop.f32.mrf.mxu0
  %120 = vdwg.mxu0
  %v121 = vmax.f32 %v118, 0.0
  %v122 = vpack.c.bf16 %v121, %v121
  %v123 = vld [vmem:[%s5] sm:$0xf]
  %v124 = vld [vmem:[%s5 + $0x4] sm:$0xf]
  %v125 = vld [vmem:[%s5 + $0x8] sm:$0xf]
  %v126 = vld [vmem:[%s5 + $0xc] sm:$0xf]
  %v127 = vld [vmem:[%s6] sm:$0x1]
  %v129 = vperm.slane %v127, 0
  %v135 = vunpack.c.l.b16 %v123
  %v136 = vunpack.c.l.b16 %v124
  %v137 = vunpack.c.l.b16 %v125
  %v138 = vunpack.c.l.b16 %v126
  %v139 = vpack.c.b16 %v136, %v135
  %v140 = vpack.c.b16 %v138, %v137
  %v144 = vsel %vm104, %v122, 0
  %146 = vmatpush.bf16.msra.mxu0 0
  %147 = vmatpush.bf16.msra.mxu0 0
  %148 = vmatpush.bf16.msra.mxu0 0
  %149 = vmatpush.bf16.msra.mxu0 0
  %150 = vmatpush.bf16.msra.mxu0 0
  %151 = vmatpush.bf16.msra.mxu0 0
  %152 = vmatpush.bf16.msra.mxu0 %v140
  %153 = vmatpush.bf16.msra.mxu0 %v139
  %154 = vmatmul.bf16.gmra.mxu0 %v144
  %v155 = vpop.f32.mrf.mxu0
  %v156 = vadd.f32 %v129, %v155
  %v157 = vpop.f32.mrf.mxu0
  %158 = vdwg.mxu0
  %159 = vst [vmem:[%s7] sm:$0xff] %v156
  // Predicated region
  $region30: #{fctd_forward_batched.1} parent=0 // pred_check
    _
  $region31: #{fctd_forward_batched.1} parent=0 // pred_check_branch
    %161 = sbr.rel (0) target = $region33
  $region32: #{fctd_forward_batched.1} parent=0 // pred_region
    _
  $region33: #{fctd_forward_batched.1} parent=0 // pred_fallthru
    _
  // Predicated region
  $region34: #{fctd_forward_batched.1} parent=0 // pred_check
    _
  $region35: #{fctd_forward_batched.1} parent=0 // pred_check_branch
    %163 = sbr.rel (0) target = $region37
  $region36: #{fctd_forward_batched.1} parent=0 // pred_region
    _
  $region37: #{fctd_forward_batched.1} parent=0 // pred_fallthru
    _

</llo_original>
